<compile_context>
chip_gen: v7x
topology: tpu7x:2x2x1
jax: 0.10.0
libtpu: 0.0.40
codegen_flags: <defaults>
</compile_context>

<pallas_src>
import functools

import jax
import jax.numpy as jnp
from jax.experimental import pallas as pl
from jax.experimental.pallas import tpu as pltpu

EPS = 1e-5
LANE = 128


def _mlp_kernel(x_ref,
                w1_ref, b1_ref,
                w2_ref, b2_ref,
                w3_ref, b3_ref,
                w4_ref, b4_ref,
                o_ref):
    # Layer 1: folded Linear+BN -> ReLU   (Dropout = identity in eval)
    h = jnp.dot(x_ref[...], w1_ref[...], preferred_element_type=jnp.float32)
    h = jnp.maximum(h + b1_ref[...], 0.0).astype(jnp.bfloat16)

    # Layer 2: folded Linear+BN -> ReLU
    h = jnp.dot(h, w2_ref[...], preferred_element_type=jnp.float32)
    h = jnp.maximum(h + b2_ref[...], 0.0).astype(jnp.bfloat16)

    # Layer 3: folded Linear+BN -> ReLU
    h = jnp.dot(h, w3_ref[...], preferred_element_type=jnp.float32)
    h = jnp.maximum(h + b3_ref[...], 0.0).astype(jnp.bfloat16)

    # Output head (columns zero-padded to lane width; sliced back in the wrapper).
    o = jnp.dot(h, w4_ref[...], preferred_element_type=jnp.float32)
    o_ref[...] = o + b4_ref[...]


def prepare_params(params):
    """Fold eval-mode BatchNorm + linear bias into the weights, cast weights to bf16,
    and pad the classifier head to a lane-dense (multiple-of-128) width.
    Call ONCE, outside the per-forward path."""

    def fold(w, b, gamma, beta, mean, var):
        scale = gamma / jnp.sqrt(var + EPS)                 # (dout,)
        w_f = (w * scale[None, :]).astype(jnp.bfloat16)     # fold scale into columns
        b_f = ((b - mean) * scale + beta).reshape(1, -1).astype(jnp.float32)
        return w_f, b_f

    w1, b1 = fold(params["w1"], params["b1"], params["bn1_gamma"],
                  params["bn1_beta"], params["bn1_mean"], params["bn1_var"])
    w2, b2 = fold(params["w2"], params["b2"], params["bn2_gamma"],
                  params["bn2_beta"], params["bn2_mean"], params["bn2_var"])
    w3, b3 = fold(params["w3"], params["b3"], params["bn3_gamma"],
                  params["bn3_beta"], params["bn3_mean"], params["bn3_var"])

    num_classes = params["w4"].shape[1]
    pad = (-num_classes) % LANE
    w4 = jnp.pad(params["w4"], ((0, 0), (0, pad))).astype(jnp.bfloat16)
    b4 = jnp.pad(params["b4"], (0, pad)).reshape(1, -1).astype(jnp.float32)

    return (w1, b1, w2, b2, w3, b3, w4, b4), num_classes


@functools.partial(jax.jit, static_argnames=("num_classes",))
def kannada_sign_model_forward(x, prepared, num_classes):
    """x: (B, input_dim) f32.  prepared: output of prepare_params (folded bf16 weights)."""
    w1, b1, w2, b2, w3, b3, w4, b4 = prepared
    B, D = x.shape
    n_out = w4.shape[1]

    # Batch tile: sublane-aligned; large batches get multiple grid steps with
    # weights DMA'd only once (index_map pinned to (0, 0)).
    TB = min(256, ((B + 7) // 8) * 8)
    B_pad = pl.cdiv(B, TB) * TB

    x = x.astype(jnp.bfloat16)
    if B_pad != B:
        x = jnp.pad(x, ((0, B_pad - B), (0, 0)))

    def resident(shape):
        return pl.BlockSpec(shape, lambda i: (0, 0))

    out = pl.pallas_call(
        _mlp_kernel,
        out_shape=jax.ShapeDtypeStruct((B_pad, n_out), jnp.float32),
        grid=(B_pad // TB,),
        in_specs=[
            pl.BlockSpec((TB, D), lambda i: (i, 0)),
            resident(w1.shape), resident(b1.shape),
            resident(w2.shape), resident(b2.shape),
            resident(w3.shape), resident(b3.shape),
            resident(w4.shape), resident(b4.shape),
        ],
        out_specs=pl.BlockSpec((TB, n_out), lambda i: (i, 0)),
        compiler_params=pltpu.CompilerParams(
            dimension_semantics=("parallel",)),
    )(x, w1, b1, w2, b2, w3, b3, w4, b4)

    return out[:B, :num_classes]


def init_params(key, input_dim, num_classes):
    """Deterministic synthetic parameters matching KannadaSignModel.__init__ shapes."""
    dims = [(input_dim, 512), (512, 256), (256, 128), (128, num_classes)]
    keys = jax.random.split(key, 16)
    p = {}
    ki = 0
    for idx, (din, dout) in enumerate(dims, start=1):
        # nn.Linear weight is (dout, din); we store the transpose (din, dout).
        p[f"w{idx}"] = (jax.random.normal(keys[ki], (din, dout), jnp.float32)
                        * (1.0 / jnp.sqrt(din))); ki += 1
        p[f"b{idx}"] = jax.random.normal(keys[ki], (dout,), jnp.float32) * 0.01; ki += 1
    for idx, dout in enumerate([512, 256, 128], start=1):
        p[f"bn{idx}_gamma"] = 1.0 + 0.1 * jax.random.normal(keys[ki], (dout,), jnp.float32); ki += 1
        p[f"bn{idx}_beta"] = 0.05 * jax.random.normal(keys[ki], (dout,), jnp.float32); ki += 1
        p[f"bn{idx}_mean"] = 0.02 * jnp.arange(dout, dtype=jnp.float32) / dout
        p[f"bn{idx}_var"] = 1.0 + 0.01 * jnp.arange(dout, dtype=jnp.float32) / dout
    return p


def reference_forward_f32(x, params):
    """Pure-JAX f32 reference of the PyTorch eval-mode forward (unfolded BN)."""
    def bn(h, g, b, m, v):
        return g * (h - m) / jnp.sqrt(v + EPS) + b

    h = x @ params["w1"] + params["b1"]
    h = jnp.maximum(bn(h, params["bn1_gamma"], params["bn1_beta"],
                       params["bn1_mean"], params["bn1_var"]), 0.0)
    h = h @ params["w2"] + params["b2"]
    h = jnp.maximum(bn(h, params["bn2_gamma"], params["bn2_beta"],
                       params["bn2_mean"], params["bn2_var"]), 0.0)
    h = h @ params["w3"] + params["b3"]
    h = jnp.maximum(bn(h, params["bn3_gamma"], params["bn3_beta"],
                       params["bn3_mean"], params["bn3_var"]), 0.0)
    return h @ params["w4"] + params["b4"]


def reference_forward_folded(x, prepared, num_classes):
    """Pure-JAX reference using the SAME folded bf16 parameters as the kernel."""
    w1, b1, w2, b2, w3, b3, w4, b4 = prepared
    h = x.astype(jnp.bfloat16)
    h = jnp.maximum(jnp.dot(h, w1, preferred_element_type=jnp.float32) + b1, 0.0)
    h = jnp.maximum(jnp.dot(h.astype(jnp.bfloat16), w2,
                            preferred_element_type=jnp.float32) + b2, 0.0)
    h = jnp.maximum(jnp.dot(h.astype(jnp.bfloat16), w3,
                            preferred_element_type=jnp.float32) + b3, 0.0)
    o = jnp.dot(h.astype(jnp.bfloat16), w4, preferred_element_type=jnp.float32) + b4
    return o[:, :num_classes]


if __name__ == "__main__":
    B = 8            # small batch (sublane-aligned)
    INPUT_DIM = 128  # landmark feature vector length (lane-aligned)
    NUM_CLASSES = 32

    key = jax.random.PRNGKey(0)
    kx, kp = jax.random.split(key)
    x = jax.random.normal(kx, (B, INPUT_DIM), jnp.float32)
    params = init_params(kp, INPUT_DIM, NUM_CLASSES)

    # Fold BN + bias into the weights ONCE (outside the per-call path).
    prepared, num_classes = prepare_params(params)
    prepared = jax.block_until_ready(prepared)

    out = kannada_sign_model_forward(x, prepared, num_classes)
    out = jax.block_until_ready(out)
    assert out.shape == (B, NUM_CLASSES)

    # Tight check vs a pure-JAX path using the exact same folded bf16 params.
    ref_folded = reference_forward_folded(x, prepared, num_classes)
    assert jnp.allclose(out, ref_folded, atol=5e-3, rtol=5e-3), \
        "mismatch vs folded bf16 JAX reference"

    # Loose check vs the f32 eval-mode PyTorch-equivalent reference
    # (bf16 weight quantization accounts for the small residual).
    ref_f32 = reference_forward_f32(x, params)
    assert jnp.allclose(out, ref_f32, atol=5e-2, rtol=5e-2), \
        "mismatch vs f32 JAX reference"

    print("KERNEL_OK")
</pallas_src>

<mosaic_0001>
module attributes {stable_mosaic.version = 11 : i64} {
  func.func @_mlp_kernel(%arg0: i32, %arg1: memref<8x128xbf16, #tpu.memory_space<vmem>>, %arg2: memref<128x512xbf16, #tpu.memory_space<vmem>>, %arg3: memref<1x512xf32, #tpu.memory_space<vmem>>, %arg4: memref<512x256xbf16, #tpu.memory_space<vmem>>, %arg5: memref<1x256xf32, #tpu.memory_space<vmem>>, %arg6: memref<256x128xbf16, #tpu.memory_space<vmem>>, %arg7: memref<1x128xf32, #tpu.memory_space<vmem>>, %arg8: memref<128x128xbf16, #tpu.memory_space<vmem>>, %arg9: memref<1x128xf32, #tpu.memory_space<vmem>>, %arg10: memref<8x128xf32, #tpu.memory_space<vmem>>) attributes {dimension_semantics = [#tpu.dimension_semantics<parallel>], iteration_bounds = array<i64: 1>, scalar_prefetch = 0 : i64, scratch_operands = 0 : i64, tpu.core_type = #tpu.core_type<tc>, window_params = [{transform_indices = @transform_0, window_bounds = array<i64: 8, 128>}, {pipeline_mode = #tpu.pipeline_mode<synchronous>, transform_indices = @transform_1, window_bounds = array<i64: 128, 512>}, {pipeline_mode = #tpu.pipeline_mode<synchronous>, transform_indices = @transform_2, window_bounds = array<i64: 1, 512>}, {pipeline_mode = #tpu.pipeline_mode<synchronous>, transform_indices = @transform_3, window_bounds = array<i64: 512, 256>}, {pipeline_mode = #tpu.pipeline_mode<synchronous>, transform_indices = @transform_4, window_bounds = array<i64: 1, 256>}, {pipeline_mode = #tpu.pipeline_mode<synchronous>, transform_indices = @transform_5, window_bounds = array<i64: 256, 128>}, {pipeline_mode = #tpu.pipeline_mode<synchronous>, transform_indices = @transform_6, window_bounds = array<i64: 1, 128>}, {pipeline_mode = #tpu.pipeline_mode<synchronous>, transform_indices = @transform_7, window_bounds = array<i64: 128, 128>}, {pipeline_mode = #tpu.pipeline_mode<synchronous>, transform_indices = @transform_8, window_bounds = array<i64: 1, 128>}, {transform_indices = @transform_9, window_bounds = array<i64: 8, 128>}]} {
    %c0 = arith.constant 0 : index
    %c0_0 = arith.constant 0 : index
    %0 = vector.load %arg1[%c0, %c0_0] : memref<8x128xbf16, #tpu.memory_space<vmem>>, vector<8x128xbf16>
    %c0_1 = arith.constant 0 : index
    %c0_2 = arith.constant 0 : index
    %1 = vector.load %arg2[%c0_1, %c0_2] : memref<128x512xbf16, #tpu.memory_space<vmem>>, vector<128x512xbf16>
    %cst = arith.constant dense<0.000000e+00> : vector<8x512xf32>
    %2 = tpu.matmul %0, %1, %cst {dimension_numbers = #tpu.dot_dimension_numbers<[1], [0], [0], [1], [0, 0, 1, 1], [], []>} : vector<8x128xbf16>, vector<128x512xbf16>, vector<8x512xf32> -> vector<8x512xf32>
    %c0_3 = arith.constant 0 : index
    %c0_4 = arith.constant 0 : index
    %3 = vector.load %arg3[%c0_3, %c0_4] : memref<1x512xf32, #tpu.memory_space<vmem>>, vector<1x512xf32>
    %4 = vector.broadcast %3 : vector<1x512xf32> to vector<8x512xf32>
    %5 = arith.addf %2, %4 : vector<8x512xf32>
    %cst_5 = arith.constant 0.000000e+00 : f32
    %6 = vector.broadcast %cst_5 : f32 to vector<8x512xf32>
    %7 = arith.maximumf %5, %6 : vector<8x512xf32>
    %8 = arith.truncf %7 : vector<8x512xf32> to vector<8x512xbf16>
    %c0_6 = arith.constant 0 : index
    %c0_7 = arith.constant 0 : index
    %9 = vector.load %arg4[%c0_6, %c0_7] : memref<512x256xbf16, #tpu.memory_space<vmem>>, vector<512x256xbf16>
    %cst_8 = arith.constant dense<0.000000e+00> : vector<8x256xf32>
    %10 = tpu.matmul %8, %9, %cst_8 {dimension_numbers = #tpu.dot_dimension_numbers<[1], [0], [0], [1], [0, 0, 1, 1], [], []>} : vector<8x512xbf16>, vector<512x256xbf16>, vector<8x256xf32> -> vector<8x256xf32>
    %c0_9 = arith.constant 0 : index
    %c0_10 = arith.constant 0 : index
    %11 = vector.load %arg5[%c0_9, %c0_10] : memref<1x256xf32, #tpu.memory_space<vmem>>, vector<1x256xf32>
    %12 = vector.broadcast %11 : vector<1x256xf32> to vector<8x256xf32>
    %13 = arith.addf %10, %12 : vector<8x256xf32>
    %cst_11 = arith.constant 0.000000e+00 : f32
    %14 = vector.broadcast %cst_11 : f32 to vector<8x256xf32>
    %15 = arith.maximumf %13, %14 : vector<8x256xf32>
    %16 = arith.truncf %15 : vector<8x256xf32> to vector<8x256xbf16>
    %c0_12 = arith.constant 0 : index
    %c0_13 = arith.constant 0 : index
    %17 = vector.load %arg6[%c0_12, %c0_13] : memref<256x128xbf16, #tpu.memory_space<vmem>>, vector<256x128xbf16>
    %cst_14 = arith.constant dense<0.000000e+00> : vector<8x128xf32>
    %18 = tpu.matmul %16, %17, %cst_14 {dimension_numbers = #tpu.dot_dimension_numbers<[1], [0], [0], [1], [0, 0, 1, 1], [], []>} : vector<8x256xbf16>, vector<256x128xbf16>, vector<8x128xf32> -> vector<8x128xf32>
    %c0_15 = arith.constant 0 : index
    %c0_16 = arith.constant 0 : index
    %19 = vector.load %arg7[%c0_15, %c0_16] : memref<1x128xf32, #tpu.memory_space<vmem>>, vector<1x128xf32>
    %20 = vector.broadcast %19 : vector<1x128xf32> to vector<8x128xf32>
    %21 = arith.addf %18, %20 : vector<8x128xf32>
    %cst_17 = arith.constant 0.000000e+00 : f32
    %22 = vector.broadcast %cst_17 : f32 to vector<8x128xf32>
    %23 = arith.maximumf %21, %22 : vector<8x128xf32>
    %24 = arith.truncf %23 : vector<8x128xf32> to vector<8x128xbf16>
    %c0_18 = arith.constant 0 : index
    %c0_19 = arith.constant 0 : index
    %25 = vector.load %arg8[%c0_18, %c0_19] : memref<128x128xbf16, #tpu.memory_space<vmem>>, vector<128x128xbf16>
    %cst_20 = arith.constant dense<0.000000e+00> : vector<8x128xf32>
    %26 = tpu.matmul %24, %25, %cst_20 {dimension_numbers = #tpu.dot_dimension_numbers<[1], [0], [0], [1], [0, 0, 1, 1], [], []>} : vector<8x128xbf16>, vector<128x128xbf16>, vector<8x128xf32> -> vector<8x128xf32>
    %c0_21 = arith.constant 0 : index
    %c0_22 = arith.constant 0 : index
    %27 = vector.load %arg9[%c0_21, %c0_22] : memref<1x128xf32, #tpu.memory_space<vmem>>, vector<1x128xf32>
    %28 = vector.broadcast %27 : vector<1x128xf32> to vector<8x128xf32>
    %29 = arith.addf %26, %28 : vector<8x128xf32>
    %c0_23 = arith.constant 0 : index
    %c0_24 = arith.constant 0 : index
    %30 = vector.load %arg10[%c0_23, %c0_24] : memref<8x128xf32, #tpu.memory_space<vmem>>, vector<8x128xf32>
    tpu.vector_store %arg10[%c0_23, %c0_24], %29 {strides = array<i32>} : memref<8x128xf32, #tpu.memory_space<vmem>>, vector<8x128xf32>,
    return
  }
  func.func @transform_0(%arg0: i32) -> (i32, i32) {
    %c0_i32 = arith.constant 0 : i32
    %c0_i32_0 = arith.constant 0 : i32
    return %arg0, %c0_i32 : i32, i32
  }
  func.func @transform_1(%arg0: i32) -> (i32, i32) {
    %c0_i32 = arith.constant 0 : i32
    %c0_i32_0 = arith.constant 0 : i32
    %c0_i32_1 = arith.constant 0 : i32
    return %c0_i32, %c0_i32_0 : i32, i32
  }
  func.func @transform_2(%arg0: i32) -> (i32, i32) {
    %c0_i32 = arith.constant 0 : i32
    %c0_i32_0 = arith.constant 0 : i32
    %c0_i32_1 = arith.constant 0 : i32
    return %c0_i32, %c0_i32_0 : i32, i32
  }
  func.func @transform_3(%arg0: i32) -> (i32, i32) {
    %c0_i32 = arith.constant 0 : i32
    %c0_i32_0 = arith.constant 0 : i32
    %c0_i32_1 = arith.constant 0 : i32
    return %c0_i32, %c0_i32_0 : i32, i32
  }
  func.func @transform_4(%arg0: i32) -> (i32, i32) {
    %c0_i32 = arith.constant 0 : i32
    %c0_i32_0 = arith.constant 0 : i32
    %c0_i32_1 = arith.constant 0 : i32
    return %c0_i32, %c0_i32_0 : i32, i32
  }
  func.func @transform_5(%arg0: i32) -> (i32, i32) {
    %c0_i32 = arith.constant 0 : i32
    %c0_i32_0 = arith.constant 0 : i32
    %c0_i32_1 = arith.constant 0 : i32
    return %c0_i32, %c0_i32_0 : i32, i32
  }
  func.func @transform_6(%arg0: i32) -> (i32, i32) {
    %c0_i32 = arith.constant 0 : i32
    %c0_i32_0 = arith.constant 0 : i32
    %c0_i32_1 = arith.constant 0 : i32
    return %c0_i32, %c0_i32_0 : i32, i32
  }
  func.func @transform_7(%arg0: i32) -> (i32, i32) {
    %c0_i32 = arith.constant 0 : i32
    %c0_i32_0 = arith.constant 0 : i32
    %c0_i32_1 = arith.constant 0 : i32
    return %c0_i32, %c0_i32_0 : i32, i32
  }
  func.func @transform_8(%arg0: i32) -> (i32, i32) {
    %c0_i32 = arith.constant 0 : i32
    %c0_i32_0 = arith.constant 0 : i32
    %c0_i32_1 = arith.constant 0 : i32
    return %c0_i32, %c0_i32_0 : i32, i32
  }
  func.func @transform_9(%arg0: i32) -> (i32, i32) {
    %c0_i32 = arith.constant 0 : i32
    %c0_i32_0 = arith.constant 0 : i32
    return %arg0, %c0_i32 : i32, i32
  }
}

</mosaic_0001>

<llo_original>
// kernel: kannada_sign_model_forward.1
$region0: #{kannada_sign_model_forward.1}
  #allocation0 [shape = 'u32[]', space=smem, size = 0x4, offset = 0x4, fixed_abs, tag = 'smem constant byte address 0x4 - core index']
  #allocation1 [shape = 'u32[144,128]{1,0:T(1,128)}', space=vmem, size = 0x12000, scoped, tag = 'internal scratch']
  %s0 = inlined_call_operand.vmem [shape: bf16[8,128], index: 0, kind: input, shape index: {}]
  %s1 = inlined_call_operand.hbm [shape: bf16[128,512], index: 1, kind: input, shape index: {}]
  %s2 = inlined_call_operand.vmem [shape: f32[1,512], index: 2, kind: input, shape index: {}]
  %s3 = inlined_call_operand.hbm [shape: bf16[512,256], index: 3, kind: input, shape index: {}]
  %s4 = inlined_call_operand.vmem [shape: f32[1,256], index: 4, kind: input, shape index: {}]
  %s5 = inlined_call_operand.hbm [shape: bf16[256,128], index: 5, kind: input, shape index: {}]
  %s6 = inlined_call_operand.vmem [shape: f32[1,128], index: 6, kind: input, shape index: {}]
  %s7 = inlined_call_operand.hbm [shape: bf16[128,128], index: 7, kind: input, shape index: {}]
  %s8 = inlined_call_operand.vmem [shape: f32[1,128], index: 8, kind: input, shape index: {}]
  %s9 = inlined_call_operand.hbm [shape: f32[8,128], index: 9, kind: output, shape index: {}]
  %s10 = sld [smem:[#allocation0]]
  $region62: #{kannada_sign_model_forward.1} parent=0
    _
  %s12 = ssub.s32 1, %s10
  %s13 = scalar_select 0, %s12, %s10
  $region1: #{kannada_sign_model_forward.1} parent=0
    #allocation2 [shape = 'u8[131072]{0}', space=vmem, size = 0x20000, scoped, tag = 'input window, operand 1, single buffered']
    #allocation3 [shape = 's32[1]{0}', space=sflag, size = 0x4, scoped, tag = 'scoped memory for kannada_sign_model_forward.1']
    #allocation4 [shape = 's32[1]{0}', space=sflag, size = 0x4, scoped, tag = 'scoped memory for kannada_sign_model_forward.1']
    #allocation5 [shape = 'u8[262144]{0}', space=vmem, size = 0x40000, scoped, tag = 'input window, operand 3, single buffered']
    #allocation6 [shape = 's32[1]{0}', space=sflag, size = 0x4, scoped, tag = 'scoped memory for kannada_sign_model_forward.1']
    #allocation7 [shape = 'u8[65536]{0}', space=vmem, size = 0x10000, scoped, tag = 'input window, operand 5, single buffered']
    #allocation8 [shape = 'u8[32768]{0}', space=vmem, size = 0x8000, scoped, tag = 'input window, operand 7, single buffered']
    #allocation9 [shape = 's32[1]{0}', space=sflag, size = 0x4, scoped, tag = 'scoped memory for kannada_sign_model_forward.1']
    #allocation10 [shape = 'u8[4096]{0}', space=vmem, size = 0x1000, scoped, tag = 'output window, operand 0, single buffered']
    %14 = vsyncpa [#allocation3], 0
    %15 = vsyncpa [#allocation6], 0
    %16 = vsyncpa [#allocation9], 0
    %17 = vsyncpa [#allocation4], 0
    // Predicated region
    $region2: #{kannada_sign_model_forward.1} parent=1 // pred_check
      _
    $region3: #{kannada_sign_model_forward.1} parent=1 // pred_check_branch
      %19 = sbr.rel (0) target = $region5
    $region4: #{kannada_sign_model_forward.1} parent=1 // pred_region
      _
    $region5: #{kannada_sign_model_forward.1} parent=1 // pred_fallthru
      _
    // Predicated region
    $region6: #{kannada_sign_model_forward.1} parent=1 // pred_check
      _
    $region7: #{kannada_sign_model_forward.1} parent=1 // pred_check_branch
      %21 = sbr.rel (0) target = $region9
    $region8: #{kannada_sign_model_forward.1} parent=1 // pred_region
      %s23 = ssub.s32 4096, 4096
      %24 = vsyncadd [#allocation3], %s23
      %s25 = sshll.u32 [#allocation2], 4
      %s26 = int_to_ptr.vmem [resolvable:$true] %s25
      %31 = dma.hbm_to_vmem [thread:$0]  %s1, 4096, %s26, [#allocation3], 256, 256, 16
    $region9: #{kannada_sign_model_forward.1} parent=1 // pred_fallthru
      _
    // Predicated region
    $region10: #{kannada_sign_model_forward.1} parent=1 // pred_check
      _
    $region11: #{kannada_sign_model_forward.1} parent=1 // pred_check_branch
      %33 = sbr.rel (0) target = $region13
    $region12: #{kannada_sign_model_forward.1} parent=1 // pred_region
      _
    $region13: #{kannada_sign_model_forward.1} parent=1 // pred_fallthru
      _
    // Predicated region
    $region14: #{kannada_sign_model_forward.1} parent=1 // pred_check
      _
    $region15: #{kannada_sign_model_forward.1} parent=1 // pred_check_branch
      %35 = sbr.rel (0) target = $region17
    $region16: #{kannada_sign_model_forward.1} parent=1 // pred_region
      %s37 = ssub.s32 8192, 8192
      %38 = vsyncadd [#allocation6], %s37
      %s39 = sshll.u32 [#allocation5], 4
      %s40 = int_to_ptr.vmem [resolvable:$true] %s39
      %45 = dma.hbm_to_vmem [thread:$0]  %s3, 8192, %s40, [#allocation6], 128, 128, 8
    $region17: #{kannada_sign_model_forward.1} parent=1 // pred_fallthru
      _
    // Predicated region
    $region18: #{kannada_sign_model_forward.1} parent=1 // pred_check
      _
    $region19: #{kannada_sign_model_forward.1} parent=1 // pred_check_branch
      %47 = sbr.rel (0) target = $region21
    $region20: #{kannada_sign_model_forward.1} parent=1 // pred_region
      _
    $region21: #{kannada_sign_model_forward.1} parent=1 // pred_fallthru
      _
    // Predicated region
    $region22: #{kannada_sign_model_forward.1} parent=1 // pred_check
      _
    $region23: #{kannada_sign_model_forward.1} parent=1 // pred_check_branch
      %49 = sbr.rel (0) target = $region25
    $region24: #{kannada_sign_model_forward.1} parent=1 // pred_region
      %s51 = ssub.s32 2048, 2048
      %52 = vsyncadd [#allocation6], %s51
      %s53 = sshll.u32 [#allocation7], 4
      %s54 = int_to_ptr.vmem [resolvable:$true] %s53
      %59 = dma.hbm_to_vmem [thread:$0]  %s5, 2048, %s54, [#allocation6], 64, 64, 4
    $region25: #{kannada_sign_model_forward.1} parent=1 // pred_fallthru
      _
    // Predicated region
    $region26: #{kannada_sign_model_forward.1} parent=1 // pred_check
      _
    $region27: #{kannada_sign_model_forward.1} parent=1 // pred_check_branch
      %61 = sbr.rel (0) target = $region29
    $region28: #{kannada_sign_model_forward.1} parent=1 // pred_region
      _
    $region29: #{kannada_sign_model_forward.1} parent=1 // pred_fallthru
      _
    // Predicated region
    $region30: #{kannada_sign_model_forward.1} parent=1 // pred_check
      _
    $region31: #{kannada_sign_model_forward.1} parent=1 // pred_check_branch
      %63 = sbr.rel (0) target = $region33
    $region32: #{kannada_sign_model_forward.1} parent=1 // pred_region
      %s65 = ssub.s32 1024, 1024
      %66 = vsyncadd [#allocation9], %s65
      %s67 = sshll.u32 [#allocation8], 4
      %s68 = int_to_ptr.vmem [resolvable:$true] %s67
      %73 = dma.hbm_to_vmem [thread:$0]  %s7, 1024, %s68, [#allocation9], 64, 64, 4
    $region33: #{kannada_sign_model_forward.1} parent=1 // pred_fallthru
      _
    // Predicated region
    $region34: #{kannada_sign_model_forward.1} parent=1 // pred_check
      _
    $region35: #{kannada_sign_model_forward.1} parent=1 // pred_check_branch
      %75 = sbr.rel (0) target = $region37
    $region36: #{kannada_sign_model_forward.1} parent=1 // pred_region
      _
    $region37: #{kannada_sign_model_forward.1} parent=1 // pred_fallthru
      _
    // Predicated region
    $region38: #{kannada_sign_model_forward.1} parent=1 // pred_check
      _
    $region39: #{kannada_sign_model_forward.1} parent=1 // pred_check_branch
      %77 = sbr.rel (0) target = $region41
    $region40: #{kannada_sign_model_forward.1} parent=1 // pred_region
      %78 = dma.done [#allocation3], 4096
    $region41: #{kannada_sign_model_forward.1} parent=1 // pred_fallthru
      _
    // Predicated region
    $region42: #{kannada_sign_model_forward.1} parent=1 // pred_check
      _
    $region43: #{kannada_sign_model_forward.1} parent=1 // pred_check_branch
      %80 = sbr.rel (0) target = $region45
    $region44: #{kannada_sign_model_forward.1} parent=1 // pred_region
      %81 = dma.done [#allocation6], 8192
    $region45: #{kannada_sign_model_forward.1} parent=1 // pred_fallthru
      _
    // Predicated region
    $region46: #{kannada_sign_model_forward.1} parent=1 // pred_check
      _
    $region47: #{kannada_sign_model_forward.1} parent=1 // pred_check_branch
      %83 = sbr.rel (0) target = $region49
    $region48: #{kannada_sign_model_forward.1} parent=1 // pred_region
      %84 = dma.done [#allocation6], 2048
    $region49: #{kannada_sign_model_forward.1} parent=1 // pred_fallthru
      _
    // Predicated region
    $region50: #{kannada_sign_model_forward.1} parent=1 // pred_check
      _
    $region51: #{kannada_sign_model_forward.1} parent=1 // pred_check_branch
      %86 = sbr.rel (0) target = $region53
    $region52: #{kannada_sign_model_forward.1} parent=1 // pred_region
      %87 = dma.done [#allocation9], 1024
    $region53: #{kannada_sign_model_forward.1} parent=1 // pred_fallthru
      _
    %v89 = vld [vmem:[%s0] sm:$0xf]
    %v90 = vld [vmem:[#allocation2] sm:$0xff]
    %v91 = vld [vmem:[#allocation2 + $0x8] sm:$0xff]
    %v92 = vld [vmem:[#allocation2 + $0x10] sm:$0xff]
    %v93 = vld [vmem:[#allocation2 + $0x18] sm:$0xff]
    %v94 = vld [vmem:[#allocation2 + $0x20] sm:$0xff]
    %v95 = vld [vmem:[#allocation2 + $0x28] sm:$0xff]
    %v96 = vld [vmem:[#allocation2 + $0x30] sm:$0xff]
    %v97 = vld [vmem:[#allocation2 + $0x38] sm:$0xff]
    %v98 = vld [vmem:[#allocation2 + $0x40] sm:$0xff]
    %v99 = vld [vmem:[#allocation2 + $0x48] sm:$0xff]
    %v100 = vld [vmem:[#allocation2 + $0x50] sm:$0xff]
    %v101 = vld [vmem:[#allocation2 + $0x58] sm:$0xff]
    %v102 = vld [vmem:[#allocation2 + $0x60] sm:$0xff]
    %v103 = vld [vmem:[#allocation2 + $0x68] sm:$0xff]
    %v104 = vld [vmem:[#allocation2 + $0x70] sm:$0xff]
    %v105 = vld [vmem:[#allocation2 + $0x78] sm:$0xff]
    %v106 = vld [vmem:[#allocation2 + $0x80] sm:$0xff]
    %v107 = vld [vmem:[#allocation2 + $0x88] sm:$0xff]
    %v108 = vld [vmem:[#allocation2 + $0x90] sm:$0xff]
    %v109 = vld [vmem:[#allocation2 + $0x98] sm:$0xff]
    %v110 = vld [vmem:[#allocation2 + $0xa0] sm:$0xff]
    %v111 = vld [vmem:[#allocation2 + $0xa8] sm:$0xff]
    %v112 = vld [vmem:[#allocation2 + $0xb0] sm:$0xff]
    %v113 = vld [vmem:[#allocation2 + $0xb8] sm:$0xff]
    %v114 = vld [vmem:[#allocation2 + $0xc0] sm:$0xff]
    %v115 = vld [vmem:[#allocation2 + $0xc8] sm:$0xff]
    %v116 = vld [vmem:[#allocation2 + $0xd0] sm:$0xff]
    %v117 = vld [vmem:[#allocation2 + $0xd8] sm:$0xff]
    %v118 = vld [vmem:[#allocation2 + $0xe0] sm:$0xff]
    %v119 = vld [vmem:[#allocation2 + $0xe8] sm:$0xff]
    %v120 = vld [vmem:[#allocation2 + $0xf0] sm:$0xff]
    %v121 = vld [vmem:[#allocation2 + $0xf8] sm:$0xff]
    %v122 = vld [vmem:[%s2] sm:$0xf]
    %v124 = vlaneseq
    %v125 = vshrl.u32 %v124, 7
    %v126 = vsub.s32 0, %v125
    %v127 = vrot.slane %v122, %v126
    %v128 = vlaneseq
    %v129 = vshrl.u32 %v128, 7
    %v130 = vsub.s32 1, %v129
    %v131 = vrot.slane %v122, %v130
    %v132 = vlaneseq
    %v133 = vshrl.u32 %v132, 7
    %v134 = vsub.s32 2, %v133
    %v135 = vrot.slane %v122, %v134
    %v136 = vlaneseq
    %v137 = vshrl.u32 %v136, 7
    %v138 = vsub.s32 3, %v137
    %v139 = vrot.slane %v122, %v138
    %v176 = vunpack.c.l.b16 %v90
    %v177 = vunpack.c.h.b16 %v90
    %v178 = vunpack.c.l.b16 %v91
    %v179 = vunpack.c.h.b16 %v91
    %v180 = vunpack.c.l.b16 %v92
    %v181 = vunpack.c.h.b16 %v92
    %v182 = vunpack.c.l.b16 %v93
    %v183 = vunpack.c.h.b16 %v93
    %v184 = vunpack.c.l.b16 %v94
    %v185 = vunpack.c.h.b16 %v94
    %v186 = vunpack.c.l.b16 %v95
    %v187 = vunpack.c.h.b16 %v95
    %v188 = vunpack.c.l.b16 %v96
    %v189 = vunpack.c.h.b16 %v96
    %v190 = vunpack.c.l.b16 %v97
    %v191 = vunpack.c.h.b16 %v97
    %v192 = vunpack.c.l.b16 %v98
    %v193 = vunpack.c.h.b16 %v98
    %v194 = vunpack.c.l.b16 %v99
    %v195 = vunpack.c.h.b16 %v99
    %v196 = vunpack.c.l.b16 %v100
    %v197 = vunpack.c.h.b16 %v100
    %v198 = vunpack.c.l.b16 %v101
    %v199 = vunpack.c.h.b16 %v101
    %v200 = vunpack.c.l.b16 %v102
    %v201 = vunpack.c.h.b16 %v102
    %v202 = vunpack.c.l.b16 %v103
    %v203 = vunpack.c.h.b16 %v103
    %v204 = vunpack.c.l.b16 %v104
    %v205 = vunpack.c.h.b16 %v104
    %v206 = vunpack.c.l.b16 %v105
    %v207 = vunpack.c.h.b16 %v105
    %v208 = vunpack.c.l.b16 %v106
    %v209 = vunpack.c.h.b16 %v106
    %v210 = vunpack.c.l.b16 %v107
    %v211 = vunpack.c.h.b16 %v107
    %v212 = vunpack.c.l.b16 %v108
    %v213 = vunpack.c.h.b16 %v108
    %v214 = vunpack.c.l.b16 %v109
    %v215 = vunpack.c.h.b16 %v109
    %v216 = vunpack.c.l.b16 %v110
    %v217 = vunpack.c.h.b16 %v110
    %v218 = vunpack.c.l.b16 %v111
    %v219 = vunpack.c.h.b16 %v111
    %v220 = vunpack.c.l.b16 %v112
    %v221 = vunpack.c.h.b16 %v112
    %v222 = vunpack.c.l.b16 %v113
    %v223 = vunpack.c.h.b16 %v113
    %v224 = vunpack.c.l.b16 %v114
    %v225 = vunpack.c.h.b16 %v114
    %v226 = vunpack.c.l.b16 %v115
    %v227 = vunpack.c.h.b16 %v115
    %v228 = vunpack.c.l.b16 %v116
    %v229 = vunpack.c.h.b16 %v116
    %v230 = vunpack.c.l.b16 %v117
    %v231 = vunpack.c.h.b16 %v117
    %v232 = vunpack.c.l.b16 %v118
    %v233 = vunpack.c.h.b16 %v118
    %v234 = vunpack.c.l.b16 %v119
    %v235 = vunpack.c.h.b16 %v119
    %v236 = vunpack.c.l.b16 %v120
    %v237 = vunpack.c.h.b16 %v120
    %v238 = vunpack.c.l.b16 %v121
    %v239 = vunpack.c.h.b16 %v121
    %v240 = vpack.c.b16 %v180, %v176
    %v241 = vpack.c.b16 %v181, %v177
    %v242 = vpack.c.b16 %v182, %v178
    %v243 = vpack.c.b16 %v183, %v179
    %v244 = vpack.c.b16 %v188, %v184
    %v245 = vpack.c.b16 %v189, %v185
    %v246 = vpack.c.b16 %v190, %v186
    %v247 = vpack.c.b16 %v191, %v187
    %v248 = vpack.c.b16 %v196, %v192
    %v249 = vpack.c.b16 %v197, %v193
    %v250 = vpack.c.b16 %v198, %v194
    %v251 = vpack.c.b16 %v199, %v195
    %v252 = vpack.c.b16 %v204, %v200
    %v253 = vpack.c.b16 %v205, %v201
    %v254 = vpack.c.b16 %v206, %v202
    %v255 = vpack.c.b16 %v207, %v203
    %v256 = vpack.c.b16 %v212, %v208
    %v257 = vpack.c.b16 %v213, %v209
    %v258 = vpack.c.b16 %v214, %v210
    %v259 = vpack.c.b16 %v215, %v211
    %v260 = vpack.c.b16 %v220, %v216
    %v261 = vpack.c.b16 %v221, %v217
    %v262 = vpack.c.b16 %v222, %v218
    %v263 = vpack.c.b16 %v223, %v219
    %v264 = vpack.c.b16 %v228, %v224
    %v265 = vpack.c.b16 %v229, %v225
    %v266 = vpack.c.b16 %v230, %v226
    %v267 = vpack.c.b16 %v231, %v227
    %v268 = vpack.c.b16 %v236, %v232
    %v269 = vpack.c.b16 %v237, %v233
    %v270 = vpack.c.b16 %v238, %v234
    %v271 = vpack.c.b16 %v239, %v235
    %304 = vmatprep.subr.bf16.mxu0 %v241
    %305 = vmatpush1.bf16.msra.mxu0 %v240
    %306 = vmatprep.subr.bf16.mxu0 %v245
    %307 = vmatpush1.bf16.msra.mxu0 %v244
    %308 = vmatprep.subr.bf16.mxu0 %v249
    %309 = vmatpush1.bf16.msra.mxu0 %v248
    %310 = vmatprep.subr.bf16.mxu0 %v253
    %311 = vmatpush1.bf16.msra.mxu0 %v252
    %312 = vmatprep.subr.bf16.mxu0 %v257
    %313 = vmatpush1.bf16.msra.mxu0 %v256
    %314 = vmatprep.subr.bf16.mxu0 %v261
    %315 = vmatpush1.bf16.msra.mxu0 %v260
    %316 = vmatprep.subr.bf16.mxu0 %v265
    %317 = vmatpush1.bf16.msra.mxu0 %v264
    %318 = vmatprep.subr.bf16.mxu0 %v269
    %319 = vmatpush1.bf16.msra.mxu0 %v268
    %320 = vmatprep.subr.bf16.mxu0 0
    %321 = vmatpush1.bf16.msra.mxu0 0
    %322 = vmatprep.subr.bf16.mxu0 0
    %323 = vmatpush1.bf16.msra.mxu0 0
    %324 = vmatprep.subr.bf16.mxu0 0
    %325 = vmatpush1.bf16.msra.mxu0 0
    %326 = vmatprep.subr.bf16.mxu0 0
    %327 = vmatpush1.bf16.msra.mxu0 0
    %328 = vmatprep.subr.bf16.mxu0 0
    %329 = vmatpush1.bf16.msra.mxu0 0
    %330 = vmatprep.subr.bf16.mxu0 0
    %331 = vmatpush1.bf16.msra.mxu0 0
    %332 = vmatprep.subr.bf16.mxu0 0
    %333 = vmatpush1.bf16.msra.mxu0 0
    %334 = vmatprep.subr.bf16.mxu0 0
    %335 = vmatpush1.bf16.msra.mxu0 0
    %336 = vmatprep.mubr.bf16.mxu0 0
    %337 = vmatmul.mubr.bf16.gmra.mrb[0].mxu0 %v89
    %v338 = vpop.f32.mrb[0].mxu0
    %v339 = vadd.f32 %v127, %v338
    %v340 = vpop.f32.mrb[0].mxu0
    %v341 = vadd.f32 %v131, %v340
    %v342 = vpop.f32.mrb[0].mxu0
    %v343 = vpop.f32.mrb[0].mxu0
    %344 = vdwg.mxu0
    %345 = vmatprep.subr.bf16.mxu0 %v243
    %346 = vmatpush1.bf16.msra.mxu0 %v242
    %347 = vmatprep.subr.bf16.mxu0 %v247
    %348 = vmatpush1.bf16.msra.mxu0 %v246
    %349 = vmatprep.subr.bf16.mxu0 %v251
    %350 = vmatpush1.bf16.msra.mxu0 %v250
    %351 = vmatprep.subr.bf16.mxu0 %v255
    %352 = vmatpush1.bf16.msra.mxu0 %v254
    %353 = vmatprep.subr.bf16.mxu0 %v259
    %354 = vmatpush1.bf16.msra.mxu0 %v258
    %355 = vmatprep.subr.bf16.mxu0 %v263
    %356 = vmatpush1.bf16.msra.mxu0 %v262
    %357 = vmatprep.subr.bf16.mxu0 %v267
    %358 = vmatpush1.bf16.msra.mxu0 %v266
    %359 = vmatprep.subr.bf16.mxu0 %v271
    %360 = vmatpush1.bf16.msra.mxu0 %v270
    %361 = vmatprep.subr.bf16.mxu0 0
    %362 = vmatpush1.bf16.msra.mxu0 0
    %363 = vmatprep.subr.bf16.mxu0 0
    %364 = vmatpush1.bf16.msra.mxu0 0
    %365 = vmatprep.subr.bf16.mxu0 0
    %366 = vmatpush1.bf16.msra.mxu0 0
    %367 = vmatprep.subr.bf16.mxu0 0
    %368 = vmatpush1.bf16.msra.mxu0 0
    %369 = vmatprep.subr.bf16.mxu0 0
    %370 = vmatpush1.bf16.msra.mxu0 0
    %371 = vmatprep.subr.bf16.mxu0 0
    %372 = vmatpush1.bf16.msra.mxu0 0
    %373 = vmatprep.subr.bf16.mxu0 0
    %374 = vmatpush1.bf16.msra.mxu0 0
    %375 = vmatprep.subr.bf16.mxu0 0
    %376 = vmatpush1.bf16.msra.mxu0 0
    %377 = vmatprep.mubr.bf16.mxu0 0
    %378 = vmatmul.mubr.bf16.gmra.mrb[0].mxu0 %v89
    %v379 = vpop.f32.mrb[0].mxu0
    %v380 = vadd.f32 %v135, %v379
    %v381 = vpop.f32.mrb[0].mxu0
    %v382 = vadd.f32 %v139, %v381
    %v383 = vpop.f32.mrb[0].mxu0
    %v384 = vpop.f32.mrb[0].mxu0
    %385 = vdwg.mxu0
    %v386 = vmax.f32 %v339, 0.0
    %v387 = vmax.f32 %v341, 0.0
    %v388 = vmax.f32 %v380, 0.0
    %v389 = vmax.f32 %v382, 0.0
    %v390 = vpack.c.bf16 %v386, %v386
    %v391 = vpack.c.bf16 %v387, %v387
    %v392 = vpack.c.bf16 %v388, %v388
    %v393 = vpack.c.bf16 %v389, %v389
    %v394 = vld [vmem:[#allocation5] sm:$0xff]
    %v395 = vld [vmem:[#allocation5 + $0x8] sm:$0xff]
    %v396 = vld [vmem:[#allocation5 + $0x10] sm:$0xff]
    %v397 = vld [vmem:[#allocation5 + $0x18] sm:$0xff]
    %v398 = vld [vmem:[#allocation5 + $0x20] sm:$0xff]
    %v399 = vld [vmem:[#allocation5 + $0x28] sm:$0xff]
    %v400 = vld [vmem:[#allocation5 + $0x30] sm:$0xff]
    %v401 = vld [vmem:[#allocation5 + $0x38] sm:$0xff]
    %v402 = vld [vmem:[#allocation5 + $0x40] sm:$0xff]
    %v403 = vld [vmem:[#allocation5 + $0x48] sm:$0xff]
    %v404 = vld [vmem:[#allocation5 + $0x50] sm:$0xff]
    %v405 = vld [vmem:[#allocation5 + $0x58] sm:$0xff]
    %v406 = vld [vmem:[#allocation5 + $0x60] sm:$0xff]
    %v407 = vld [vmem:[#allocation5 + $0x68] sm:$0xff]
    %v408 = vld [vmem:[#allocation5 + $0x70] sm:$0xff]
    %v409 = vld [vmem:[#allocation5 + $0x78] sm:$0xff]
    %v410 = vld [vmem:[#allocation5 + $0x80] sm:$0xff]
    %v411 = vld [vmem:[#allocation5 + $0x88] sm:$0xff]
    %v412 = vld [vmem:[#allocation5 + $0x90] sm:$0xff]
    %v413 = vld [vmem:[#allocation5 + $0x98] sm:$0xff]
    %v414 = vld [vmem:[#allocation5 + $0xa0] sm:$0xff]
    %v415 = vld [vmem:[#allocation5 + $0xa8] sm:$0xff]
    %v416 = vld [vmem:[#allocation5 + $0xb0] sm:$0xff]
    %v417 = vld [vmem:[#allocation5 + $0xb8] sm:$0xff]
    %v418 = vld [vmem:[#allocation5 + $0xc0] sm:$0xff]
    %v419 = vld [vmem:[#allocation5 + $0xc8] sm:$0xff]
    %v420 = vld [vmem:[#allocation5 + $0xd0] sm:$0xff]
    %v421 = vld [vmem:[#allocation5 + $0xd8] sm:$0xff]
    %v422 = vld [vmem:[#allocation5 + $0xe0] sm:$0xff]
    %v423 = vld [vmem:[#allocation5 + $0xe8] sm:$0xff]
    %v424 = vld [vmem:[#allocation5 + $0xf0] sm:$0xff]
    %v425 = vld [vmem:[#allocation5 + $0xf8] sm:$0xff]
    %v426 = vld [vmem:[#allocation5 + $0x100] sm:$0xff]
    %v427 = vld [vmem:[#allocation5 + $0x108] sm:$0xff]
    %v428 = vld [vmem:[#allocation5 + $0x110] sm:$0xff]
    %v429 = vld [vmem:[#allocation5 + $0x118] sm:$0xff]
    %v430 = vld [vmem:[#allocation5 + $0x120] sm:$0xff]
    %v431 = vld [vmem:[#allocation5 + $0x128] sm:$0xff]
    %v432 = vld [vmem:[#allocation5 + $0x130] sm:$0xff]
    %v433 = vld [vmem:[#allocation5 + $0x138] sm:$0xff]
    %v434 = vld [vmem:[#allocation5 + $0x140] sm:$0xff]
    %v435 = vld [vmem:[#allocation5 + $0x148] sm:$0xff]
    %v436 = vld [vmem:[#allocation5 + $0x150] sm:$0xff]
    %v437 = vld [vmem:[#allocation5 + $0x158] sm:$0xff]
    %v438 = vld [vmem:[#allocation5 + $0x160] sm:$0xff]
    %v439 = vld [vmem:[#allocation5 + $0x168] sm:$0xff]
    %v440 = vld [vmem:[#allocation5 + $0x170] sm:$0xff]
    %v441 = vld [vmem:[#allocation5 + $0x178] sm:$0xff]
    %v442 = vld [vmem:[#allocation5 + $0x180] sm:$0xff]
    %v443 = vld [vmem:[#allocation5 + $0x188] sm:$0xff]
    %v444 = vld [vmem:[#allocation5 + $0x190] sm:$0xff]
    %v445 = vld [vmem:[#allocation5 + $0x198] sm:$0xff]
    %v446 = vld [vmem:[#allocation5 + $0x1a0] sm:$0xff]
    %v447 = vld [vmem:[#allocation5 + $0x1a8] sm:$0xff]
    %v448 = vld [vmem:[#allocation5 + $0x1b0] sm:$0xff]
    %v449 = vld [vmem:[#allocation5 + $0x1b8] sm:$0xff]
    %v450 = vld [vmem:[#allocation5 + $0x1c0] sm:$0xff]
    %v451 = vld [vmem:[#allocation5 + $0x1c8] sm:$0xff]
    %v452 = vld [vmem:[#allocation5 + $0x1d0] sm:$0xff]
    %v453 = vld [vmem:[#allocation5 + $0x1d8] sm:$0xff]
    %v454 = vld [vmem:[#allocation5 + $0x1e0] sm:$0xff]
    %v455 = vld [vmem:[#allocation5 + $0x1e8] sm:$0xff]
    %v456 = vld [vmem:[#allocation5 + $0x1f0] sm:$0xff]
    %v457 = vld [vmem:[#allocation5 + $0x1f8] sm:$0xff]
    %v458 = vld [vmem:[%s4] sm:$0x3]
    %v460 = vlaneseq
    %v461 = vshrl.u32 %v460, 7
    %v462 = vsub.s32 0, %v461
    %v463 = vrot.slane %v458, %v462
    %v464 = vlaneseq
    %v465 = vshrl.u32 %v464, 7
    %v466 = vsub.s32 1, %v465
    %v467 = vrot.slane %v458, %v466
    %v534 = vunpack.c.l.b16 %v394
    %v535 = vunpack.c.h.b16 %v394
    %v536 = vunpack.c.l.b16 %v395
    %v537 = vunpack.c.h.b16 %v395
    %v538 = vunpack.c.l.b16 %v396
    %v539 = vunpack.c.h.b16 %v396
    %v540 = vunpack.c.l.b16 %v397
    %v541 = vunpack.c.h.b16 %v397
    %v542 = vunpack.c.l.b16 %v398
    %v543 = vunpack.c.h.b16 %v398
    %v544 = vunpack.c.l.b16 %v399
    %v545 = vunpack.c.h.b16 %v399
    %v546 = vunpack.c.l.b16 %v400
    %v547 = vunpack.c.h.b16 %v400
    %v548 = vunpack.c.l.b16 %v401
    %v549 = vunpack.c.h.b16 %v401
    %v550 = vunpack.c.l.b16 %v402
    %v551 = vunpack.c.h.b16 %v402
    %v552 = vunpack.c.l.b16 %v403
    %v553 = vunpack.c.h.b16 %v403
    %v554 = vunpack.c.l.b16 %v404
    %v555 = vunpack.c.h.b16 %v404
    %v556 = vunpack.c.l.b16 %v405
    %v557 = vunpack.c.h.b16 %v405
    %v558 = vunpack.c.l.b16 %v406
    %v559 = vunpack.c.h.b16 %v406
    %v560 = vunpack.c.l.b16 %v407
    %v561 = vunpack.c.h.b16 %v407
    %v562 = vunpack.c.l.b16 %v408
    %v563 = vunpack.c.h.b16 %v408
    %v564 = vunpack.c.l.b16 %v409
    %v565 = vunpack.c.h.b16 %v409
    %v566 = vunpack.c.l.b16 %v410
    %v567 = vunpack.c.h.b16 %v410
    %v568 = vunpack.c.l.b16 %v411
    %v569 = vunpack.c.h.b16 %v411
    %v570 = vunpack.c.l.b16 %v412
    %v571 = vunpack.c.h.b16 %v412
    %v572 = vunpack.c.l.b16 %v413
    %v573 = vunpack.c.h.b16 %v413
    %v574 = vunpack.c.l.b16 %v414
    %v575 = vunpack.c.h.b16 %v414
    %v576 = vunpack.c.l.b16 %v415
    %v577 = vunpack.c.h.b16 %v415
    %v578 = vunpack.c.l.b16 %v416
    %v579 = vunpack.c.h.b16 %v416
    %v580 = vunpack.c.l.b16 %v417
    %v581 = vunpack.c.h.b16 %v417
    %v582 = vunpack.c.l.b16 %v418
    %v583 = vunpack.c.h.b16 %v418
    %v584 = vunpack.c.l.b16 %v419
    %v585 = vunpack.c.h.b16 %v419
    %v586 = vunpack.c.l.b16 %v420
    %v587 = vunpack.c.h.b16 %v420
    %v588 = vunpack.c.l.b16 %v421
    %v589 = vunpack.c.h.b16 %v421
    %v590 = vunpack.c.l.b16 %v422
    %v591 = vunpack.c.h.b16 %v422
    %v592 = vunpack.c.l.b16 %v423
    %v593 = vunpack.c.h.b16 %v423
    %v594 = vunpack.c.l.b16 %v424
    %v595 = vunpack.c.h.b16 %v424
    %v596 = vunpack.c.l.b16 %v425
    %v597 = vunpack.c.h.b16 %v425
    %v598 = vunpack.c.l.b16 %v426
    %v599 = vunpack.c.h.b16 %v426
    %v600 = vunpack.c.l.b16 %v427
    %v601 = vunpack.c.h.b16 %v427
    %v602 = vunpack.c.l.b16 %v428
    %v603 = vunpack.c.h.b16 %v428
    %v604 = vunpack.c.l.b16 %v429
    %v605 = vunpack.c.h.b16 %v429
    %v606 = vunpack.c.l.b16 %v430
    %v607 = vunpack.c.h.b16 %v430
    %v608 = vunpack.c.l.b16 %v431
    %v609 = vunpack.c.h.b16 %v431
    %v610 = vunpack.c.l.b16 %v432
    %v611 = vunpack.c.h.b16 %v432
    %v612 = vunpack.c.l.b16 %v433
    %v613 = vunpack.c.h.b16 %v433
    %v614 = vunpack.c.l.b16 %v434
    %v615 = vunpack.c.h.b16 %v434
    %v616 = vunpack.c.l.b16 %v435
    %v617 = vunpack.c.h.b16 %v435
    %v618 = vunpack.c.l.b16 %v436
    %v619 = vunpack.c.h.b16 %v436
    %v620 = vunpack.c.l.b16 %v437
    %v621 = vunpack.c.h.b16 %v437
    %v622 = vunpack.c.l.b16 %v438
    %v623 = vunpack.c.h.b16 %v438
    %v624 = vunpack.c.l.b16 %v439
    %v625 = vunpack.c.h.b16 %v439
    %v626 = vunpack.c.l.b16 %v440
    %v627 = vunpack.c.h.b16 %v440
    %v628 = vunpack.c.l.b16 %v441
    %v629 = vunpack.c.h.b16 %v441
    %v630 = vunpack.c.l.b16 %v442
    %v631 = vunpack.c.h.b16 %v442
    %v632 = vunpack.c.l.b16 %v443
    %v633 = vunpack.c.h.b16 %v443
    %v634 = vunpack.c.l.b16 %v444
    %v635 = vunpack.c.h.b16 %v444
    %v636 = vunpack.c.l.b16 %v445
    %v637 = vunpack.c.h.b16 %v445
    %v638 = vunpack.c.l.b16 %v446
    %v639 = vunpack.c.h.b16 %v446
    %v640 = vunpack.c.l.b16 %v447
    %v641 = vunpack.c.h.b16 %v447
    %v642 = vunpack.c.l.b16 %v448
    %v643 = vunpack.c.h.b16 %v448
    %v644 = vunpack.c.l.b16 %v449
    %v645 = vunpack.c.h.b16 %v449
    %v646 = vunpack.c.l.b16 %v450
    %v647 = vunpack.c.h.b16 %v450
    %v648 = vunpack.c.l.b16 %v451
    %v649 = vunpack.c.h.b16 %v451
    %v650 = vunpack.c.l.b16 %v452
    %v651 = vunpack.c.h.b16 %v452
    %v652 = vunpack.c.l.b16 %v453
    %v653 = vunpack.c.h.b16 %v453
    %v654 = vunpack.c.l.b16 %v454
    %v655 = vunpack.c.h.b16 %v454
    %v656 = vunpack.c.l.b16 %v455
    %v657 = vunpack.c.h.b16 %v455
    %v658 = vunpack.c.l.b16 %v456
    %v659 = vunpack.c.h.b16 %v456
    %v660 = vunpack.c.l.b16 %v457
    %v661 = vunpack.c.h.b16 %v457
    %v662 = vpack.c.b16 %v536, %v534
    %v663 = vpack.c.b16 %v537, %v535
    %v664 = vpack.c.b16 %v540, %v538
    %v665 = vpack.c.b16 %v541, %v539
    %v666 = vpack.c.b16 %v544, %v542
    %v667 = vpack.c.b16 %v545, %v543
    %v668 = vpack.c.b16 %v548, %v546
    %v669 = vpack.c.b16 %v549, %v547
    %v670 = vpack.c.b16 %v552, %v550
    %v671 = vpack.c.b16 %v553, %v551
    %v672 = vpack.c.b16 %v556, %v554
    %v673 = vpack.c.b16 %v557, %v555
    %v674 = vpack.c.b16 %v560, %v558
    %v675 = vpack.c.b16 %v561, %v559
    %v676 = vpack.c.b16 %v564, %v562
    %v677 = vpack.c.b16 %v565, %v563
    %v678 = vpack.c.b16 %v568, %v566
    %v679 = vpack.c.b16 %v569, %v567
    %v680 = vpack.c.b16 %v572, %v570
    %v681 = vpack.c.b16 %v573, %v571
    %v682 = vpack.c.b16 %v576, %v574
    %v683 = vpack.c.b16 %v577, %v575
    %v684 = vpack.c.b16 %v580, %v578
    %v685 = vpack.c.b16 %v581, %v579
    %v686 = vpack.c.b16 %v584, %v582
    %v687 = vpack.c.b16 %v585, %v583
    %v688 = vpack.c.b16 %v588, %v586
    %v689 = vpack.c.b16 %v589, %v587
    %v690 = vpack.c.b16 %v592, %v590
    %v691 = vpack.c.b16 %v593, %v591
    %v692 = vpack.c.b16 %v596, %v594
    %v693 = vpack.c.b16 %v597, %v595
    %v694 = vpack.c.b16 %v600, %v598
    %v695 = vpack.c.b16 %v601, %v599
    %v696 = vpack.c.b16 %v604, %v602
    %v697 = vpack.c.b16 %v605, %v603
    %v698 = vpack.c.b16 %v608, %v606
    %v699 = vpack.c.b16 %v609, %v607
    %v700 = vpack.c.b16 %v612, %v610
    %v701 = vpack.c.b16 %v613, %v611
    %v702 = vpack.c.b16 %v616, %v614
    %v703 = vpack.c.b16 %v617, %v615
    %v704 = vpack.c.b16 %v620, %v618
    %v705 = vpack.c.b16 %v621, %v619
    %v706 = vpack.c.b16 %v624, %v622
    %v707 = vpack.c.b16 %v625, %v623
    %v708 = vpack.c.b16 %v628, %v626
    %v709 = vpack.c.b16 %v629, %v627
    %v710 = vpack.c.b16 %v632, %v630
    %v711 = vpack.c.b16 %v633, %v631
    %v712 = vpack.c.b16 %v636, %v634
    %v713 = vpack.c.b16 %v637, %v635
    %v714 = vpack.c.b16 %v640, %v638
    %v715 = vpack.c.b16 %v641, %v639
    %v716 = vpack.c.b16 %v644, %v642
    %v717 = vpack.c.b16 %v645, %v643
    %v718 = vpack.c.b16 %v648, %v646
    %v719 = vpack.c.b16 %v649, %v647
    %v720 = vpack.c.b16 %v652, %v650
    %v721 = vpack.c.b16 %v653, %v651
    %v722 = vpack.c.b16 %v656, %v654
    %v723 = vpack.c.b16 %v657, %v655
    %v724 = vpack.c.b16 %v660, %v658
    %v725 = vpack.c.b16 %v661, %v659
    %790 = vmatprep.subr.bf16.mxu0 %v663
    %791 = vmatpush1.bf16.msra.mxu0 %v662
    %792 = vmatprep.subr.bf16.mxu0 %v665
    %793 = vmatpush1.bf16.msra.mxu0 %v664
    %794 = vmatprep.subr.bf16.mxu0 %v667
    %795 = vmatpush1.bf16.msra.mxu0 %v666
    %796 = vmatprep.subr.bf16.mxu0 %v669
    %797 = vmatpush1.bf16.msra.mxu0 %v668
    %798 = vmatprep.subr.bf16.mxu0 %v671
    %799 = vmatpush1.bf16.msra.mxu0 %v670
    %800 = vmatprep.subr.bf16.mxu0 %v673
    %801 = vmatpush1.bf16.msra.mxu0 %v672
    %802 = vmatprep.subr.bf16.mxu0 %v675
    %803 = vmatpush1.bf16.msra.mxu0 %v674
    %804 = vmatprep.subr.bf16.mxu0 %v677
    %805 = vmatpush1.bf16.msra.mxu0 %v676
    %806 = vmatprep.subr.bf16.mxu0 %v679
    %807 = vmatpush1.bf16.msra.mxu0 %v678
    %808 = vmatprep.subr.bf16.mxu0 %v681
    %809 = vmatpush1.bf16.msra.mxu0 %v680
    %810 = vmatprep.subr.bf16.mxu0 %v683
    %811 = vmatpush1.bf16.msra.mxu0 %v682
    %812 = vmatprep.subr.bf16.mxu0 %v685
    %813 = vmatpush1.bf16.msra.mxu0 %v684
    %814 = vmatprep.subr.bf16.mxu0 %v687
    %815 = vmatpush1.bf16.msra.mxu0 %v686
    %816 = vmatprep.subr.bf16.mxu0 %v689
    %817 = vmatpush1.bf16.msra.mxu0 %v688
    %818 = vmatprep.subr.bf16.mxu0 %v691
    %819 = vmatpush1.bf16.msra.mxu0 %v690
    %820 = vmatprep.subr.bf16.mxu0 %v693
    %821 = vmatpush1.bf16.msra.mxu0 %v692
    %822 = vmatprep.mubr.bf16.mxu0 %v391
    %823 = vmatmul.mubr.bf16.gmra.mrb[0].mxu0 %v390
    %v824 = vpop.f32.mrb[0].mxu0
    %v825 = vadd.f32 %v463, %v824
    %v826 = vpop.f32.mrb[0].mxu0
    %v827 = vadd.f32 %v467, %v826
    %v828 = vpop.f32.mrb[0].mxu0
    %v829 = vpop.f32.mrb[0].mxu0
    %830 = vdwg.mxu0
    %831 = vmatprep.subr.bf16.mxu0 %v695
    %832 = vmatpush1.bf16.msra.mxu0 %v694
    %833 = vmatprep.subr.bf16.mxu0 %v697
    %834 = vmatpush1.bf16.msra.mxu0 %v696
    %835 = vmatprep.subr.bf16.mxu0 %v699
    %836 = vmatpush1.bf16.msra.mxu0 %v698
    %837 = vmatprep.subr.bf16.mxu0 %v701
    %838 = vmatpush1.bf16.msra.mxu0 %v700
    %839 = vmatprep.subr.bf16.mxu0 %v703
    %840 = vmatpush1.bf16.msra.mxu0 %v702
    %841 = vmatprep.subr.bf16.mxu0 %v705
    %842 = vmatpush1.bf16.msra.mxu0 %v704
    %843 = vmatprep.subr.bf16.mxu0 %v707
    %844 = vmatpush1.bf16.msra.mxu0 %v706
    %845 = vmatprep.subr.bf16.mxu0 %v709
    %846 = vmatpush1.bf16.msra.mxu0 %v708
    %847 = vmatprep.subr.bf16.mxu0 %v711
    %848 = vmatpush1.bf16.msra.mxu0 %v710
    %849 = vmatprep.subr.bf16.mxu0 %v713
    %850 = vmatpush1.bf16.msra.mxu0 %v712
    %851 = vmatprep.subr.bf16.mxu0 %v715
    %852 = vmatpush1.bf16.msra.mxu0 %v714
    %853 = vmatprep.subr.bf16.mxu0 %v717
    %854 = vmatpush1.bf16.msra.mxu0 %v716
    %855 = vmatprep.subr.bf16.mxu0 %v719
    %856 = vmatpush1.bf16.msra.mxu0 %v718
    %857 = vmatprep.subr.bf16.mxu0 %v721
    %858 = vmatpush1.bf16.msra.mxu0 %v720
    %859 = vmatprep.subr.bf16.mxu0 %v723
    %860 = vmatpush1.bf16.msra.mxu0 %v722
    %861 = vmatprep.subr.bf16.mxu0 %v725
    %862 = vmatpush1.bf16.msra.mxu0 %v724
    %863 = vmatprep.mubr.bf16.mxu0 %v393
    %864 = vmatmul.mubr.bf16.gmra.mrb[0].mxu0 %v392
    %v865 = vpop.f32.mrb[0].mxu0
    %v866 = vadd.f32 %v825, %v865
    %v867 = vpop.f32.mrb[0].mxu0
    %v868 = vadd.f32 %v827, %v867
    %v869 = vpop.f32.mrb[0].mxu0
    %v870 = vpop.f32.mrb[0].mxu0
    %871 = vdwg.mxu0
    %v872 = vmax.f32 %v866, 0.0
    %v873 = vmax.f32 %v868, 0.0
    %v874 = vpack.c.bf16 %v872, %v872
    %v875 = vpack.c.bf16 %v873, %v873
    %v876 = vld [vmem:[#allocation7] sm:$0xf]
    %v877 = vld [vmem:[#allocation7 + $0x4] sm:$0xf]
    %v878 = vld [vmem:[#allocation7 + $0x8] sm:$0xf]
    %v879 = vld [vmem:[#allocation7 + $0xc] sm:$0xf]
    %v880 = vld [vmem:[#allocation7 + $0x10] sm:$0xf]
    %v881 = vld [vmem:[#allocation7 + $0x14] sm:$0xf]
    %v882 = vld [vmem:[#allocation7 + $0x18] sm:$0xf]
    %v883 = vld [vmem:[#allocation7 + $0x1c] sm:$0xf]
    %v884 = vld [vmem:[#allocation7 + $0x20] sm:$0xf]
    %v885 = vld [vmem:[#allocation7 + $0x24] sm:$0xf]
    %v886 = vld [vmem:[#allocation7 + $0x28] sm:$0xf]
    %v887 = vld [vmem:[#allocation7 + $0x2c] sm:$0xf]
    %v888 = vld [vmem:[#allocation7 + $0x30] sm:$0xf]
    %v889 = vld [vmem:[#allocation7 + $0x34] sm:$0xf]
    %v890 = vld [vmem:[#allocation7 + $0x38] sm:$0xf]
    %v891 = vld [vmem:[#allocation7 + $0x3c] sm:$0xf]
    %v892 = vld [vmem:[#allocation7 + $0x40] sm:$0xf]
    %v893 = vld [vmem:[#allocation7 + $0x44] sm:$0xf]
    %v894 = vld [vmem:[#allocation7 + $0x48] sm:$0xf]
    %v895 = vld [vmem:[#allocation7 + $0x4c] sm:$0xf]
    %v896 = vld [vmem:[#allocation7 + $0x50] sm:$0xf]
    %v897 = vld [vmem:[#allocation7 + $0x54] sm:$0xf]
    %v898 = vld [vmem:[#allocation7 + $0x58] sm:$0xf]
    %v899 = vld [vmem:[#allocation7 + $0x5c] sm:$0xf]
    %v900 = vld [vmem:[#allocation7 + $0x60] sm:$0xf]
    %v901 = vld [vmem:[#allocation7 + $0x64] sm:$0xf]
    %v902 = vld [vmem:[#allocation7 + $0x68] sm:$0xf]
    %v903 = vld [vmem:[#allocation7 + $0x6c] sm:$0xf]
    %v904 = vld [vmem:[#allocation7 + $0x70] sm:$0xf]
    %v905 = vld [vmem:[#allocation7 + $0x74] sm:$0xf]
    %v906 = vld [vmem:[#allocation7 + $0x78] sm:$0xf]
    %v907 = vld [vmem:[#allocation7 + $0x7c] sm:$0xf]
    %v908 = vld [vmem:[%s6] sm:$0x1]
    %v910 = vlaneseq
    %v911 = vshrl.u32 %v910, 7
    %v912 = vsub.s32 0, %v911
    %v913 = vrot.slane %v908, %v912
    %v947 = vunpack.c.l.b16 %v876
    %v948 = vunpack.c.l.b16 %v877
    %v949 = vunpack.c.l.b16 %v878
    %v950 = vunpack.c.l.b16 %v879
    %v951 = vunpack.c.l.b16 %v880
    %v952 = vunpack.c.l.b16 %v881
    %v953 = vunpack.c.l.b16 %v882
    %v954 = vunpack.c.l.b16 %v883
    %v955 = vunpack.c.l.b16 %v884
    %v956 = vunpack.c.l.b16 %v885
    %v957 = vunpack.c.l.b16 %v886
    %v958 = vunpack.c.l.b16 %v887
    %v959 = vunpack.c.l.b16 %v888
    %v960 = vunpack.c.l.b16 %v889
    %v961 = vunpack.c.l.b16 %v890
    %v962 = vunpack.c.l.b16 %v891
    %v963 = vunpack.c.l.b16 %v892
    %v964 = vunpack.c.l.b16 %v893
    %v965 = vunpack.c.l.b16 %v894
    %v966 = vunpack.c.l.b16 %v895
    %v967 = vunpack.c.l.b16 %v896
    %v968 = vunpack.c.l.b16 %v897
    %v969 = vunpack.c.l.b16 %v898
    %v970 = vunpack.c.l.b16 %v899
    %v971 = vunpack.c.l.b16 %v900
    %v972 = vunpack.c.l.b16 %v901
    %v973 = vunpack.c.l.b16 %v902
    %v974 = vunpack.c.l.b16 %v903
    %v975 = vunpack.c.l.b16 %v904
    %v976 = vunpack.c.l.b16 %v905
    %v977 = vunpack.c.l.b16 %v906
    %v978 = vunpack.c.l.b16 %v907
    %v979 = vpack.c.b16 %v948, %v947
    %v980 = vpack.c.b16 %v950, %v949
    %v981 = vpack.c.b16 %v952, %v951
    %v982 = vpack.c.b16 %v954, %v953
    %v983 = vpack.c.b16 %v956, %v955
    %v984 = vpack.c.b16 %v958, %v957
    %v985 = vpack.c.b16 %v960, %v959
    %v986 = vpack.c.b16 %v962, %v961
    %v987 = vpack.c.b16 %v964, %v963
    %v988 = vpack.c.b16 %v966, %v965
    %v989 = vpack.c.b16 %v968, %v967
    %v990 = vpack.c.b16 %v970, %v969
    %v991 = vpack.c.b16 %v972, %v971
    %v992 = vpack.c.b16 %v974, %v973
    %v993 = vpack.c.b16 %v976, %v975
    %v994 = vpack.c.b16 %v978, %v977
    %1011 = vmatprep.subr.bf16.mxu0 0
    %1012 = vmatpush1.bf16.msra.mxu0 %v979
    %1013 = vmatprep.subr.bf16.mxu0 0
    %1014 = vmatpush1.bf16.msra.mxu0 %v980
    %1015 = vmatprep.subr.bf16.mxu0 0
    %1016 = vmatpush1.bf16.msra.mxu0 %v981
    %1017 = vmatprep.subr.bf16.mxu0 0
    %1018 = vmatpush1.bf16.msra.mxu0 %v982
    %1019 = vmatprep.subr.bf16.mxu0 0
    %1020 = vmatpush1.bf16.msra.mxu0 %v983
    %1021 = vmatprep.subr.bf16.mxu0 0
    %1022 = vmatpush1.bf16.msra.mxu0 %v984
    %1023 = vmatprep.subr.bf16.mxu0 0
    %1024 = vmatpush1.bf16.msra.mxu0 %v985
    %1025 = vmatprep.subr.bf16.mxu0 0
    %1026 = vmatpush1.bf16.msra.mxu0 %v986
    %1027 = vmatprep.subr.bf16.mxu0 0
    %1028 = vmatpush1.bf16.msra.mxu0 %v987
    %1029 = vmatprep.subr.bf16.mxu0 0
    %1030 = vmatpush1.bf16.msra.mxu0 %v988
    %1031 = vmatprep.subr.bf16.mxu0 0
    %1032 = vmatpush1.bf16.msra.mxu0 %v989
    %1033 = vmatprep.subr.bf16.mxu0 0
    %1034 = vmatpush1.bf16.msra.mxu0 %v990
    %1035 = vmatprep.subr.bf16.mxu0 0
    %1036 = vmatpush1.bf16.msra.mxu0 %v991
    %1037 = vmatprep.subr.bf16.mxu0 0
    %1038 = vmatpush1.bf16.msra.mxu0 %v992
    %1039 = vmatprep.subr.bf16.mxu0 0
    %1040 = vmatpush1.bf16.msra.mxu0 %v993
    %1041 = vmatprep.subr.bf16.mxu0 0
    %1042 = vmatpush1.bf16.msra.mxu0 %v994
    %1043 = vmatprep.mubr.bf16.mxu0 %v875
    %1044 = vmatmul.mubr.bf16.gmra.mrb[0].mxu0 %v874
    %v1045 = vpop.f32.mrb[0].mxu0
    %v1046 = vadd.f32 %v913, %v1045
    %v1047 = vpop.f32.mrb[0].mxu0
    %v1048 = vpop.f32.mrb[0].mxu0
    %v1049 = vpop.f32.mrb[0].mxu0
    %1050 = vdwg.mxu0
    %v1051 = vmax.f32 %v1046, 0.0
    %v1052 = vpack.c.bf16 %v1051, %v1051
    %v1053 = vld [vmem:[#allocation8] sm:$0xf]
    %v1054 = vld [vmem:[#allocation8 + $0x4] sm:$0xf]
    %v1055 = vld [vmem:[#allocation8 + $0x8] sm:$0xf]
    %v1056 = vld [vmem:[#allocation8 + $0xc] sm:$0xf]
    %v1057 = vld [vmem:[#allocation8 + $0x10] sm:$0xf]
    %v1058 = vld [vmem:[#allocation8 + $0x14] sm:$0xf]
    %v1059 = vld [vmem:[#allocation8 + $0x18] sm:$0xf]
    %v1060 = vld [vmem:[#allocation8 + $0x1c] sm:$0xf]
    %v1061 = vld [vmem:[#allocation8 + $0x20] sm:$0xf]
    %v1062 = vld [vmem:[#allocation8 + $0x24] sm:$0xf]
    %v1063 = vld [vmem:[#allocation8 + $0x28] sm:$0xf]
    %v1064 = vld [vmem:[#allocation8 + $0x2c] sm:$0xf]
    %v1065 = vld [vmem:[#allocation8 + $0x30] sm:$0xf]
    %v1066 = vld [vmem:[#allocation8 + $0x34] sm:$0xf]
    %v1067 = vld [vmem:[#allocation8 + $0x38] sm:$0xf]
    %v1068 = vld [vmem:[#allocation8 + $0x3c] sm:$0xf]
    %v1069 = vld [vmem:[%s8] sm:$0x1]
    %v1071 = vlaneseq
    %v1072 = vshrl.u32 %v1071, 7
    %v1073 = vsub.s32 0, %v1072
    %v1074 = vrot.slane %v1069, %v1073
    %v1092 = vunpack.c.l.b16 %v1053
    %v1093 = vunpack.c.l.b16 %v1054
    %v1094 = vunpack.c.l.b16 %v1055
    %v1095 = vunpack.c.l.b16 %v1056
    %v1096 = vunpack.c.l.b16 %v1057
    %v1097 = vunpack.c.l.b16 %v1058
    %v1098 = vunpack.c.l.b16 %v1059
    %v1099 = vunpack.c.l.b16 %v1060
    %v1100 = vunpack.c.l.b16 %v1061
    %v1101 = vunpack.c.l.b16 %v1062
    %v1102 = vunpack.c.l.b16 %v1063
    %v1103 = vunpack.c.l.b16 %v1064
    %v1104 = vunpack.c.l.b16 %v1065
    %v1105 = vunpack.c.l.b16 %v1066
    %v1106 = vunpack.c.l.b16 %v1067
    %v1107 = vunpack.c.l.b16 %v1068
    %v1108 = vpack.c.b16 %v1093, %v1092
    %v1109 = vpack.c.b16 %v1095, %v1094
    %v1110 = vpack.c.b16 %v1097, %v1096
    %v1111 = vpack.c.b16 %v1099, %v1098
    %v1112 = vpack.c.b16 %v1101, %v1100
    %v1113 = vpack.c.b16 %v1103, %v1102
    %v1114 = vpack.c.b16 %v1105, %v1104
    %v1115 = vpack.c.b16 %v1107, %v1106
    %1124 = vmatprep.subr.bf16.mxu0 0
    %1125 = vmatpush1.bf16.msra.mxu0 %v1108
    %1126 = vmatprep.subr.bf16.mxu0 0
    %1127 = vmatpush1.bf16.msra.mxu0 %v1109
    %1128 = vmatprep.subr.bf16.mxu0 0
    %1129 = vmatpush1.bf16.msra.mxu0 %v1110
    %1130 = vmatprep.subr.bf16.mxu0 0
    %1131 = vmatpush1.bf16.msra.mxu0 %v1111
    %1132 = vmatprep.subr.bf16.mxu0 0
    %1133 = vmatpush1.bf16.msra.mxu0 %v1112
    %1134 = vmatprep.subr.bf16.mxu0 0
    %1135 = vmatpush1.bf16.msra.mxu0 %v1113
    %1136 = vmatprep.subr.bf16.mxu0 0
    %1137 = vmatpush1.bf16.msra.mxu0 %v1114
    %1138 = vmatprep.subr.bf16.mxu0 0
    %1139 = vmatpush1.bf16.msra.mxu0 %v1115
    %1140 = vmatprep.subr.bf16.mxu0 0
    %1141 = vmatpush1.bf16.msra.mxu0 0
    %1142 = vmatprep.subr.bf16.mxu0 0
    %1143 = vmatpush1.bf16.msra.mxu0 0
    %1144 = vmatprep.subr.bf16.mxu0 0
    %1145 = vmatpush1.bf16.msra.mxu0 0
    %1146 = vmatprep.subr.bf16.mxu0 0
    %1147 = vmatpush1.bf16.msra.mxu0 0
    %1148 = vmatprep.subr.bf16.mxu0 0
    %1149 = vmatpush1.bf16.msra.mxu0 0
    %1150 = vmatprep.subr.bf16.mxu0 0
    %1151 = vmatpush1.bf16.msra.mxu0 0
    %1152 = vmatprep.subr.bf16.mxu0 0
    %1153 = vmatpush1.bf16.msra.mxu0 0
    %1154 = vmatprep.subr.bf16.mxu0 0
    %1155 = vmatpush1.bf16.msra.mxu0 0
    %1156 = vmatprep.mubr.bf16.mxu0 0
    %1157 = vmatmul.mubr.bf16.gmra.mrb[0].mxu0 %v1052
    %v1158 = vpop.f32.mrb[0].mxu0
    %v1159 = vadd.f32 %v1074, %v1158
    %v1160 = vpop.f32.mrb[0].mxu0
    %v1161 = vpop.f32.mrb[0].mxu0
    %v1162 = vpop.f32.mrb[0].mxu0
    %1163 = vdwg.mxu0
    %1164 = vst [vmem:[#allocation10] sm:$0xff] %v1159
    // Predicated region
    $region54: #{kannada_sign_model_forward.1} parent=1 // pred_check
      _
    $region55: #{kannada_sign_model_forward.1} parent=1 // pred_check_branch
      %1166 = sbr.rel (0) target = $region57
    $region56: #{kannada_sign_model_forward.1} parent=1 // pred_region
      %s1168 = ssub.s32 128, 128
      %1169 = vsyncadd [#allocation4], %s1168
      %s1171 = sshll.u32 [#allocation10], 4
      %s1172 = int_to_ptr.vmem [resolvable:$true] %s1171
      %1174 = dma.vmem_to_hbm [thread:$0]  %s1172, 128, %s9, [#allocation4]
    $region57: #{kannada_sign_model_forward.1} parent=1 // pred_fallthru
      _
    // Predicated region
    $region58: #{kannada_sign_model_forward.1} parent=1 // pred_check
      _
    $region59: #{kannada_sign_model_forward.1} parent=1 // pred_check_branch
      %1176 = sbr.rel (0) target = $region61
    $region60: #{kannada_sign_model_forward.1} parent=1 // pred_region
      %1177 = dma.done [#allocation4], 128
    $region61: #{kannada_sign_model_forward.1} parent=1 // pred_fallthru
      _
    %1178 = vsyncpa [#allocation3], 1
    %1179 = vsyncpa [#allocation6], 1
    %1180 = vsyncpa [#allocation9], 1
    %1181 = vsyncpa [#allocation4], 1

</llo_original>
